<compile_context>
chip_gen: v5e
topology: v5e:2x2
jax: 0.10.0
libtpu: 0.0.40
codegen_flags: <defaults>
</compile_context>

<pallas_src>
import jax
import jax.numpy as jnp
from jax.experimental import pallas as pl
from jax.experimental.pallas import tpu as pltpu

_LANE = 128


def _emission_loc_kernel(mult_ref, latent_ref, loc_ref):
    # mult_ref: (1,) f32 scalar parameter in SMEM.
    # latent_ref / loc_ref: (tile_rows, w) lane-dense tiles in VMEM.
    # f32 scalar * latent promotes like PyTorch; astype is a no-op for f32.
    loc_ref[...] = (mult_ref[0] * latent_ref[...]).astype(loc_ref.dtype)


def _pick_lane_width(n):
    """Largest w (multiple of 128, w <= 1024) dividing n, or 0 if none."""
    if n % _LANE != 0:
        return 0
    m = n // _LANE
    for d in (8, 7, 6, 5, 4, 3, 2, 1):
        if m % d == 0:
            return _LANE * d
    return _LANE  # unreachable


def _pick_tile_rows(rows, w, in_itemsize, out_itemsize, total_bytes,
                    target_tile_bytes=16 << 20, split_threshold_bytes=4 << 20):
    """Rows per block: big tiles, dtype-aware sublane rounding, >=2 programs
    for v7x megacore when the input is large enough to be worth splitting."""
    sub = max(1, 32 // in_itemsize)  # 8 for f32, 16 for bf16, 32 for int8/fp8
    if rows <= sub:
        return rows  # block spans the full row extent (always a legal block)
    row_bytes = w * (in_itemsize + out_itemsize)
    tile_rows = max(sub, min(rows, target_tile_bytes // row_bytes))
    if total_bytes > split_threshold_bytes:
        # Ensure at least 2 grid steps so v7x's two TensorCores both work.
        tile_rows = min(tile_rows, pl.cdiv(rows, 2))
    return max(sub, (tile_rows // sub) * sub)


def emission_forward(mult, latent, scale, *, min_pallas_bytes=1 << 20):
    """Emission forward pass.

    Returns (loc, scale) of the fully-expanded Normal distribution:
      loc   = mult * latent       dtype = result_type(float32, latent.dtype)
      scale = f32 scalar          (broadcasts lazily; never materialized)
    """
    latent = jnp.asarray(latent)
    mult = jnp.asarray(mult, dtype=jnp.float32)
    out_dtype = jnp.result_type(jnp.float32, latent.dtype)  # PyTorch promotion
    scale_out = jnp.asarray(scale, dtype=jnp.float32)

    n = latent.size
    total_bytes = n * latent.dtype.itemsize

    # Fast path: for tiny inputs (the actual lgssm shapes) the pallas_call
    # launch + per-grid-step overhead dwarfs a single fused multiply.
    if n == 0 or total_bytes < min_pallas_bytes:
        return (mult * latent).astype(out_dtype), scale_out

    orig_shape = latent.shape
    w = _pick_lane_width(n)
    if w:
        rows = n // w
        x2d = latent.reshape(rows, w)          # zero-copy lane-dense view
        pad = 0
    else:
        # Rare fallback (n not a multiple of 128): pad < 128 elements.
        w = _LANE
        rows = pl.cdiv(n, w)
        pad = rows * w - n
        x2d = jnp.pad(latent.reshape(-1), (0, pad)).reshape(rows, w)

    tile_rows = _pick_tile_rows(rows, w, latent.dtype.itemsize,
                                jnp.dtype(out_dtype).itemsize, total_bytes)
    grid = (pl.cdiv(rows, tile_rows),)

    loc2d = pl.pallas_call(
        _emission_loc_kernel,
        out_shape=jax.ShapeDtypeStruct((rows, w), out_dtype),
        grid=grid,
        in_specs=[
            # Scalar parameter in SMEM (no tiling), always 32-bit.
            pl.BlockSpec(memory_space=pltpu.MemorySpace.SMEM),
            pl.BlockSpec((tile_rows, w), lambda i: (i, 0)),
        ],
        out_specs=pl.BlockSpec((tile_rows, w), lambda i: (i, 0)),
        compiler_params=pltpu.CompilerParams(
            dimension_semantics=("parallel",),
            # 2 bufs x (in + out) x <=8 MiB = 32 MiB + headroom; fits v7x's
            # 64 MiB physical VMEM, comfortable on v5e/v6e (128 MiB).
            vmem_limit_bytes=48 << 20,
        ),
    )(mult.reshape(1), x2d)

    if pad:
        loc = loc2d.reshape(-1)[:n].reshape(orig_shape)
    else:
        loc = loc2d.reshape(orig_shape)
    return loc, scale_out


if __name__ == "__main__":
    key = jax.random.PRNGKey(0)
    init_mult, scale = 0.9, 0.1
    # Module __init__: mult = Tensor([init_mult]).squeeze() -> 0-d parameter.
    mult = jnp.asarray(init_mult, dtype=jnp.float32)
    k1, k2, k3, k4 = jax.random.split(key, 4)

    # 1) lgssm-sized latents[-1]: (batch, num_particles) -> below the Pallas
    #    threshold, plain-XLA fast path.
    latent_small = jax.random.normal(k1, (2, 128), dtype=jnp.float32)
    loc_s, scale_out = emission_forward(mult, latent_small, scale)
    jax.block_until_ready((loc_s, scale_out))
    assert loc_s.shape == latent_small.shape
    assert jnp.allclose(loc_s, init_mult * latent_small, atol=1e-6, rtol=1e-6)
    assert jnp.allclose(scale_out, jnp.float32(scale), atol=1e-7, rtol=1e-7)

    # 2) Same small shape forced through the Pallas kernel (single full block).
    loc_sp, _ = emission_forward(mult, latent_small, scale, min_pallas_bytes=0)
    jax.block_until_ready(loc_sp)
    assert jnp.allclose(loc_sp, init_mult * latent_small, atol=1e-6, rtol=1e-6)

    # 3) Above-threshold input: zero-copy lane-dense reshape, no pad/slice.
    latent_big = jax.random.normal(k2, (512, 1024), dtype=jnp.float32)  # 2 MiB
    loc_b, _ = emission_forward(mult, latent_big, scale)
    jax.block_until_ready(loc_b)
    assert jnp.allclose(loc_b, init_mult * latent_big, atol=1e-6, rtol=1e-6)

    # 4) Ragged row count: (2,5,1280) -> (20, 640), tile_rows=16, 2 grid steps
    #    with a masked edge block (no row padding).
    latent_ragged = jax.random.normal(k3, (2, 5, 1280), dtype=jnp.float32)
    loc_r, _ = emission_forward(mult, latent_ragged, scale, min_pallas_bytes=0)
    jax.block_until_ready(loc_r)
    assert jnp.allclose(loc_r, init_mult * latent_ragged, atol=1e-6, rtol=1e-6)

    # 5) bf16 latents: loc follows PyTorch promotion (f32 param * bf16 -> f32).
    latent_bf16 = jax.random.normal(k4, (16, 256), dtype=jnp.bfloat16)
    loc_h, _ = emission_forward(mult, latent_bf16, scale, min_pallas_bytes=0)
    jax.block_until_ready(loc_h)
    assert loc_h.dtype == jnp.float32
    assert jnp.allclose(loc_h, mult * latent_bf16, atol=1e-6, rtol=1e-6)

    # TODO(synk): the torch.distributions.Normal / BatchShapeMode wrapper has
    # no Pallas equivalent; the kernel returns (loc, scalar scale) and the
    # downstream log-prob / sampling step should consume them directly.
    print("KERNEL_OK")
</pallas_src>

<mosaic_0001>
module attributes {stable_mosaic.version = 11 : i64} {
  func.func @_emission_loc_kernel(%arg0: i32, %arg1: memref<1xf32, #tpu.memory_space<smem>>, %arg2: memref<1x256xf32, #tpu.memory_space<vmem>>, %arg3: memref<1x256xf32, #tpu.memory_space<vmem>>) attributes {dimension_semantics = [#tpu.dimension_semantics<parallel>], iteration_bounds = array<i64: 1>, scalar_prefetch = 0 : i64, scratch_operands = 0 : i64, tpu.core_type = #tpu.core_type<tc>, window_params = [{transform_indices = @transform_0, window_bounds = array<i64: 1>}, {transform_indices = @transform_1, window_bounds = array<i64: 1, 256>}, {transform_indices = @transform_2, window_bounds = array<i64: 1, 256>}]} {
    %c0 = arith.constant 0 : index
    %0 = memref.load %arg1[%c0] : memref<1xf32, #tpu.memory_space<smem>>
    %c0_0 = arith.constant 0 : index
    %c0_1 = arith.constant 0 : index
    %1 = vector.load %arg2[%c0_0, %c0_1] : memref<1x256xf32, #tpu.memory_space<vmem>>, vector<1x256xf32>
    %2 = vector.broadcast %0 : f32 to vector<1x256xf32>
    %3 = arith.mulf %2, %1 : vector<1x256xf32>
    %c0_2 = arith.constant 0 : index
    %c0_3 = arith.constant 0 : index
    %4 = vector.load %arg3[%c0_2, %c0_3] : memref<1x256xf32, #tpu.memory_space<vmem>>, vector<1x256xf32>
    tpu.vector_store %arg3[%c0_2, %c0_3], %3 {strides = array<i32>} : memref<1x256xf32, #tpu.memory_space<vmem>>, vector<1x256xf32>,
    return
  }
  func.func @transform_0(%arg0: i32) -> i32 {
    %c0_i32 = arith.constant 0 : i32
    %c0_i32_0 = arith.constant 0 : i32
    return %c0_i32 : i32
  }
  func.func @transform_1(%arg0: i32) -> (i32, i32) {
    %c0_i32 = arith.constant 0 : i32
    %c0_i32_0 = arith.constant 0 : i32
    return %arg0, %c0_i32 : i32, i32
  }
  func.func @transform_2(%arg0: i32) -> (i32, i32) {
    %c0_i32 = arith.constant 0 : i32
    %c0_i32_0 = arith.constant 0 : i32
    return %arg0, %c0_i32 : i32, i32
  }
}

</mosaic_0001>

<llo_original>
// kernel: tpu_custom_call.1
$region0: #{tpu_custom_call.1}
  #allocation0 [shape = 'u32[]', space=smem, size = 0x4, offset = 0x4, fixed_abs, tag = 'smem constant byte address 0x4 - core index']
  #allocation1 [shape = 'u32[72,128]{1,0:T(1,128)}', space=vmem, size = 0x9000, scoped, tag = 'internal scratch']
  #allocation2 [shape = 'f32[1]{0:T(128)S(6)}', space=smem, size = 0x200, scoped, tag = 'scoped memory for tpu_custom_call.1']
  %s0 = inlined_call_operand.<no memory space> [shape: f32[1], index: 0, kind: input, shape index: {}]
  %s1 = inlined_call_operand.vmem [shape: f32[1,256], index: 1, kind: input, shape index: {}]
  %s2 = inlined_call_operand.hbm [shape: f32[1,256], index: 2, kind: output, shape index: {}]
  %s3 = sld [smem:[#allocation0]]
  $region18: #{tpu_custom_call.1} parent=0
    _
  %s5 = ssub.s32 1, %s3
  %s6 = scalar_select 0, %s5, %s3
  %7 = sst [smem:[#allocation2]] %s0
  $region1: #{tpu_custom_call.1} parent=0
    #allocation3 [shape = 'u8[1024]{0}', space=vmem, size = 0x400, scoped, tag = 'output window, operand 0, single buffered']
    #allocation4 [shape = 's32[1]{0}', space=sflag, size = 0x4, scoped, tag = 'scoped memory for tpu_custom_call.1']
    %8 = vsyncpa [#allocation4], 0
    // Predicated region
    $region2: #{tpu_custom_call.1} parent=1 // pred_check
      _
    $region3: #{tpu_custom_call.1} parent=1 // pred_check_branch
      %10 = sbr.rel (0) target = $region5
    $region4: #{tpu_custom_call.1} parent=1 // pred_region
      _
    $region5: #{tpu_custom_call.1} parent=1 // pred_fallthru
      _
    // Predicated region
    $region6: #{tpu_custom_call.1} parent=1 // pred_check
      _
    $region7: #{tpu_custom_call.1} parent=1 // pred_check_branch
      %12 = sbr.rel (0) target = $region9
    $region8: #{tpu_custom_call.1} parent=1 // pred_region
      _
    $region9: #{tpu_custom_call.1} parent=1 // pred_fallthru
      _
    %s13 = sld [smem:[#allocation2]]
    %v14 = vld [vmem:[%s1] sm:$0x3]
    %v15 = vstv %s13
    %v16 = vmul.f32 %v15, %v14
    %v17 = vlaneseq
    %vm18 = vcmp.ge.s32.totalorder %v17, 0
    %vm19 = vcmp.lt.s32.totalorder %v17, 256
    %vm20 = vmand %vm18, %vm19
    %21 = vst.msk [vmem:[#allocation3] sm:$0x3] %vm20, %v16
    // Predicated region
    $region10: #{tpu_custom_call.1} parent=1 // pred_check
      _
    $region11: #{tpu_custom_call.1} parent=1 // pred_check_branch
      %23 = sbr.rel (0) target = $region13
    $region12: #{tpu_custom_call.1} parent=1 // pred_region
      %25 = vsyncadd [#allocation4], 0
      %s27 = sshll.u32 [#allocation3], 4
      %s28 = int_to_ptr.vmem [resolvable:$true] %s27
      %s29 = sshll.u32 %s2, 4
      %s30 = int_to_ptr.hbm [resolvable:$true] %s29
      %32 = dma.vmem_to_hbm [thread:$0]  %s28, 32, %s30, [#allocation4]
    $region13: #{tpu_custom_call.1} parent=1 // pred_fallthru
      _
    // Predicated region
    $region14: #{tpu_custom_call.1} parent=1 // pred_check
      _
    $region15: #{tpu_custom_call.1} parent=1 // pred_check_branch
      %34 = sbr.rel (0) target = $region17
    $region16: #{tpu_custom_call.1} parent=1 // pred_region
      %36 = dma.done [#allocation4], 32
    $region17: #{tpu_custom_call.1} parent=1 // pred_fallthru
      _
    %37 = vsyncpa [#allocation4], 1

</llo_original>
